<compile_context>
chip_gen: v5e
topology: v5e:2x2
jax: 0.10.0
libtpu: 0.0.40
codegen_flags: <defaults>
</compile_context>

<pallas_src>
import functools

import jax
import jax.numpy as jnp
from jax.experimental import pallas as pl
from jax.experimental.pallas import tpu as pltpu


def _round_up(a, b):
    return ((a + b - 1) // b) * b


def _vmem_capacity_bytes():
    try:
        cap = getattr(pltpu.get_tpu_info(), "vmem_capacity_bytes", None)
        if cap:
            return int(cap)
    except Exception:
        pass
    return 64 << 20  # conservative (v7x-sized) fallback, safe on every generation


# -----------------------------------------------------------------------------
# Kernel
# -----------------------------------------------------------------------------
def adapter_kernel(x_ref, g_ref, bt_ref, w1_ref, b1_ref, w2_ref, b2_ref, o_ref,
                   *, eps, d_real):
    """One (tile_n, Dp) row tile: LayerNorm -> Linear -> SiLU -> Linear."""
    x = x_ref[...].astype(jnp.float32)
    inv_d = 1.0 / d_real

    # ---- LayerNorm(out_dim, eps) over the real (unpadded) channel dim ----
    # Padded lanes of x are zero, so sum(x) and sum(x*x) already equal the sums
    # over the real D lanes; var = E[x^2] - mean^2 needs no lane mask.
    mean = jnp.sum(x, axis=-1, keepdims=True) * inv_d
    ex2 = jnp.sum(x * x, axis=-1, keepdims=True) * inv_d
    var = jnp.maximum(ex2 - mean * mean, 0.0)
    xn = (x - mean) * jax.lax.rsqrt(var + eps)
    # gamma/beta are zero-padded -> padded lanes of xn become exactly zero.
    xn = xn * g_ref[...] + bt_ref[...]

    # ---- Linear(out_dim -> in_dim) + SiLU ----
    mm_dtype = w1_ref.dtype               # bf16 operands by default, f32 accumulate
    h = jnp.dot(xn.astype(mm_dtype), w1_ref[...],
                preferred_element_type=jnp.float32)
    h = h + b1_ref[...]
    h = h * jax.nn.sigmoid(h)             # SiLU (sigmoid lands on the EUP slot)

    # ---- Linear(in_dim -> out_dim) ----
    y = jnp.dot(h.astype(mm_dtype), w2_ref[...],
                preferred_element_type=jnp.float32)
    y = y + b2_ref[...]

    # ---- Dropout(p): identity in eval / inference mode ----
    # TODO(synk): training-mode dropout (pltpu.prng_random_bits mask) not emitted.
    o_ref[...] = y.astype(o_ref.dtype)


# -----------------------------------------------------------------------------
# Wrapper
# -----------------------------------------------------------------------------
def prepare_adapter_params(gamma, beta, w1, b1, w2, b2, *,
                           matmul_dtype=jnp.bfloat16):
    """Transpose / lane-pad / cast parameters once (hoist out of the hot path).

    PyTorch Linear layout: w1: (in_dim, out_dim), w2: (out_dim, in_dim).
    """
    D = gamma.shape[-1]               # out_dim (LayerNorm / residual dim)
    H = w1.shape[0]                   # in_dim  (adapter bottleneck dim)
    Dp = _round_up(D, 128)
    Hp = _round_up(H, 128)
    gamma_p = jnp.pad(gamma.astype(jnp.float32), (0, Dp - D)).reshape(1, Dp)
    beta_p = jnp.pad(beta.astype(jnp.float32), (0, Dp - D)).reshape(1, Dp)
    w1_t = jnp.pad(w1.T.astype(matmul_dtype), ((0, Dp - D), (0, Hp - H)))  # (Dp, Hp)
    w2_t = jnp.pad(w2.T.astype(matmul_dtype), ((0, Hp - H), (0, Dp - D)))  # (Hp, Dp)
    b1_p = jnp.pad(b1.astype(jnp.float32), (0, Hp - H)).reshape(1, Hp)
    b2_p = jnp.pad(b2.astype(jnp.float32), (0, Dp - D)).reshape(1, Dp)
    return (gamma_p, beta_p, w1_t, b1_p, w2_t, b2_p), (D, H, Dp, Hp)


def _pick_tile_n(N, Dp, Hp, x_itemsize, w_itemsize, vmem_cap, sub, user_tile_n):
    # Resident weights (single-buffered) + biases (with sublane padding).
    w_bytes = 2 * Dp * Hp * w_itemsize + (2 * Dp + Hp) * 4 * 8
    # Per-row VMEM: double-buffered x + out tiles plus f32 intermediates
    # (x copy, xn, y, bf16 cast copies ~ 16*Dp bytes; h f32 + cast ~ 8*Hp bytes).
    per_row = 4 * Dp * x_itemsize + 16 * Dp + 8 * Hp
    budget = int(vmem_cap * 0.7) - w_bytes
    rows_budget = max(budget, 1 << 20) // per_row
    rows_target = max((vmem_cap // 8) // max(Dp * x_itemsize, 1), sub)
    tile_n = min(rows_budget, rows_target, 4096)
    if user_tile_n is not None:
        tile_n = min(tile_n, user_tile_n)
    tile_n = max(sub, (tile_n // sub) * sub)
    # Keep >= 2 grid steps when possible so the "parallel" row axis can shard
    # across v7x's two TensorCores.
    if N > sub and tile_n >= N:
        tile_n = _round_up(pl.cdiv(N, 2), sub)
    return tile_n, w_bytes, per_row


def adapter_forward_prepared(x, params, dims, *, eps=1e-5, tile_n=None):
    gamma_p, beta_p, w1_t, b1_p, w2_t, b2_p = params
    D, H, Dp, Hp = dims
    orig_shape = x.shape
    x2d = x.reshape(-1, D)
    N = x2d.shape[0]
    x_itemsize = jnp.dtype(x.dtype).itemsize
    w_itemsize = jnp.dtype(w1_t.dtype).itemsize
    sub = {4: 8, 2: 16, 1: 32}.get(x_itemsize, 8)

    vmem_cap = _vmem_capacity_bytes()
    tile_n, w_bytes, per_row = _pick_tile_n(
        N, Dp, Hp, x_itemsize, w_itemsize, vmem_cap, sub, tile_n)

    # Lane padding only when the channel dim is not already lane-dense; rows
    # are never padded (the ragged edge block is clipped by the pipeline).
    x_in = x2d if Dp == D else jnp.pad(x2d, ((0, 0), (0, Dp - D)))

    grid = (pl.cdiv(N, tile_n),)

    # Scoped VMEM: pipelined tiles + resident weights + f32 intermediates,
    # clamped to physical capacity minus headroom (v7x-safe: <= cap - 8 MiB).
    needed = 2 * w_bytes + tile_n * per_row + (2 << 20)
    vmem_limit = int(min(max(needed, 16 << 20), vmem_cap - (8 << 20)))

    cost = pl.CostEstimate(
        flops=int(4 * N * Dp * Hp),
        transcendentals=int(N * (Hp + 1)),
        bytes_accessed=int(2 * N * Dp * x_itemsize + 2 * Dp * Hp * w_itemsize),
    )

    kern = functools.partial(adapter_kernel, eps=eps, d_real=D)
    out_shape = jax.ShapeDtypeStruct((N, Dp), x.dtype)
    x_spec = pl.BlockSpec((tile_n, Dp), lambda i: (i, 0))
    o_spec = pl.BlockSpec((tile_n, Dp), lambda i: (i, 0))
    const_shapes = [(1, Dp), (1, Dp), (Dp, Hp), (1, Hp), (Hp, Dp), (1, Dp)]

    def run(single_buffer):
        if single_buffer:
            # Constant-index operands never change block -> single buffer them.
            const_specs = [pl.BlockSpec(s, lambda i: (0, 0),
                                        pipeline_mode=pl.Buffered(1))
                           for s in const_shapes]
        else:
            const_specs = [pl.BlockSpec(s, lambda i: (0, 0))
                           for s in const_shapes]
        return pl.pallas_call(
            kern,
            out_shape=out_shape,
            grid_spec=pltpu.PrefetchScalarGridSpec(
                num_scalar_prefetch=0,
                grid=grid,
                in_specs=[x_spec] + const_specs,
                out_specs=o_spec,
            ),
            compiler_params=pltpu.CompilerParams(
                dimension_semantics=("parallel",),   # rows independent -> megacore
                vmem_limit_bytes=vmem_limit,
            ),
            cost_estimate=cost,
        )(x_in, gamma_p, beta_p, w1_t, b1_p, w2_t, b2_p)

    try:
        out = run(single_buffer=True)
    except Exception:
        # Fallback for jax versions without BlockSpec pipeline_mode support.
        out = run(single_buffer=False)

    if Dp != D:
        out = out[:, :D]
    return out.reshape(orig_shape)


def adapter_forward(x, gamma, beta, w1, b1, w2, b2, *, eps=1e-5, tile_n=None,
                    matmul_dtype=None):
    """x: (..., out_dim). PyTorch weights w1: (in_dim, out_dim), w2: (out_dim, in_dim)."""
    if matmul_dtype is None:
        # bf16 MXU operands (f32 accumulate) are the fast path on v5e/v6e/v7x;
        # pass matmul_dtype=jnp.float32 for bit-accurate GEMMs.
        matmul_dtype = jnp.bfloat16
    params, dims = prepare_adapter_params(gamma, beta, w1, b1, w2, b2,
                                          matmul_dtype=matmul_dtype)
    return adapter_forward_prepared(x, params, dims, eps=eps, tile_n=tile_n)


# -----------------------------------------------------------------------------
# Reference / init / self-test
# -----------------------------------------------------------------------------
def init_adapter_params(key, out_dim, in_dim, dtype=jnp.float32):
    """Deterministic synthetic init matching nn.LayerNorm / nn.Linear shapes."""
    k1, k2, k3, k4 = jax.random.split(key, 4)
    gamma = jnp.ones((out_dim,), dtype)            # LayerNorm weight
    beta = jnp.zeros((out_dim,), dtype)            # LayerNorm bias
    bound1 = 1.0 / (out_dim ** 0.5)
    w1 = jax.random.uniform(k1, (in_dim, out_dim), dtype, -bound1, bound1)
    b1 = jax.random.uniform(k2, (in_dim,), dtype, -bound1, bound1)
    bound2 = 1.0 / (in_dim ** 0.5)
    w2 = jax.random.uniform(k3, (out_dim, in_dim), dtype, -bound2, bound2)
    b2 = jax.random.uniform(k4, (out_dim,), dtype, -bound2, bound2)
    return gamma, beta, w1, b1, w2, b2


def adapter_reference(x, gamma, beta, w1, b1, w2, b2, *, eps=1e-5):
    xf = x.astype(jnp.float32)
    mean = jnp.mean(xf, axis=-1, keepdims=True)
    var = jnp.mean(jnp.square(xf - mean), axis=-1, keepdims=True)
    xn = (xf - mean) * jax.lax.rsqrt(var + eps) * gamma + beta
    h = xn @ w1.T.astype(jnp.float32) + b1
    h = h * jax.nn.sigmoid(h)
    return (h @ w2.T.astype(jnp.float32) + b2).astype(x.dtype)


if __name__ == "__main__":
    out_dim = 32   # LayerNorm / residual dim
    in_dim = 64    # adapter bottleneck dim
    batch, seq = 2, 8

    key = jax.random.PRNGKey(0)
    kx, kp = jax.random.split(key)
    x = jax.random.normal(kx, (batch, seq, out_dim), jnp.float32)
    params = init_adapter_params(kp, out_dim, in_dim)

    y_ref = adapter_reference(x, *params)

    # f32-operand path: validates the fused kernel logic at tight tolerance.
    y_f32 = jax.block_until_ready(
        adapter_forward(x, *params, matmul_dtype=jnp.float32))
    assert y_f32.shape == x.shape
    assert jnp.allclose(y_f32, y_ref, atol=1e-4, rtol=1e-4), "f32 path mismatch"

    # Default fast path: bf16 MXU operands, f32 accumulation (looser tolerance).
    y = jax.block_until_ready(adapter_forward(x, *params))
    assert y.shape == x.shape
    assert jnp.allclose(y, y_ref, atol=5e-2, rtol=5e-2), "bf16 path mismatch"

    print("KERNEL_OK")
</pallas_src>

<mosaic_0001>
module attributes {stable_mosaic.version = 11 : i64} {
  func.func @adapter_kernel(%arg0: i32, %arg1: memref<8x128xf32, #tpu.memory_space<vmem>>, %arg2: memref<1x128xf32, #tpu.memory_space<vmem>>, %arg3: memref<1x128xf32, #tpu.memory_space<vmem>>, %arg4: memref<128x128xf32, #tpu.memory_space<vmem>>, %arg5: memref<1x128xf32, #tpu.memory_space<vmem>>, %arg6: memref<128x128xf32, #tpu.memory_space<vmem>>, %arg7: memref<1x128xf32, #tpu.memory_space<vmem>>, %arg8: memref<8x128xf32, #tpu.memory_space<vmem>>) attributes {dimension_semantics = [#tpu.dimension_semantics<parallel>], iteration_bounds = array<i64: 2>, scalar_prefetch = 0 : i64, scratch_operands = 0 : i64, tpu.core_type = #tpu.core_type<tc>, window_params = [{transform_indices = @transform_0, window_bounds = array<i64: 8, 128>}, {pipeline_mode = #tpu.pipeline_mode<synchronous>, transform_indices = @transform_1, window_bounds = array<i64: 1, 128>}, {pipeline_mode = #tpu.pipeline_mode<synchronous>, transform_indices = @transform_2, window_bounds = array<i64: 1, 128>}, {pipeline_mode = #tpu.pipeline_mode<synchronous>, transform_indices = @transform_3, window_bounds = array<i64: 128, 128>}, {pipeline_mode = #tpu.pipeline_mode<synchronous>, transform_indices = @transform_4, window_bounds = array<i64: 1, 128>}, {pipeline_mode = #tpu.pipeline_mode<synchronous>, transform_indices = @transform_5, window_bounds = array<i64: 128, 128>}, {pipeline_mode = #tpu.pipeline_mode<synchronous>, transform_indices = @transform_6, window_bounds = array<i64: 1, 128>}, {transform_indices = @transform_7, window_bounds = array<i64: 8, 128>}]} {
    %c0 = arith.constant 0 : index
    %c0_0 = arith.constant 0 : index
    %0 = vector.load %arg1[%c0, %c0_0] : memref<8x128xf32, #tpu.memory_space<vmem>>, vector<8x128xf32>
    %cst = arith.constant dense<0.000000e+00> : vector<8xf32>
    %1 = vector.multi_reduction <add>, %0, %cst [1] : vector<8x128xf32> to vector<8xf32>
    %2 = vector.shape_cast %1 : vector<8xf32> to vector<8x1xf32>
    %cst_1 = arith.constant 3.125000e-02 : f32
    %3 = vector.broadcast %cst_1 : f32 to vector<8x1xf32>
    %4 = arith.mulf %2, %3 : vector<8x1xf32>
    %5 = arith.mulf %0, %0 : vector<8x128xf32>
    %cst_2 = arith.constant dense<0.000000e+00> : vector<8xf32>
    %6 = vector.multi_reduction <add>, %5, %cst_2 [1] : vector<8x128xf32> to vector<8xf32>
    %7 = vector.shape_cast %6 : vector<8xf32> to vector<8x1xf32>
    %cst_3 = arith.constant 3.125000e-02 : f32
    %8 = vector.broadcast %cst_3 : f32 to vector<8x1xf32>
    %9 = arith.mulf %7, %8 : vector<8x1xf32>
    %10 = arith.mulf %4, %4 : vector<8x1xf32>
    %11 = arith.subf %9, %10 : vector<8x1xf32>
    %cst_4 = arith.constant 0.000000e+00 : f32
    %12 = vector.broadcast %cst_4 : f32 to vector<8x1xf32>
    %13 = arith.maximumf %11, %12 : vector<8x1xf32>
    %14 = vector.broadcast %4 : vector<8x1xf32> to vector<8x128xf32>
    %15 = arith.subf %0, %14 : vector<8x128xf32>
    %cst_5 = arith.constant 9.99999974E-6 : f32
    %16 = vector.broadcast %cst_5 : f32 to vector<8x1xf32>
    %17 = arith.addf %13, %16 : vector<8x1xf32>
    %18 = math.rsqrt %17 : vector<8x1xf32>
    %19 = vector.broadcast %18 : vector<8x1xf32> to vector<8x128xf32>
    %20 = arith.mulf %15, %19 : vector<8x128xf32>
    %c0_6 = arith.constant 0 : index
    %c0_7 = arith.constant 0 : index
    %21 = vector.load %arg2[%c0_6, %c0_7] : memref<1x128xf32, #tpu.memory_space<vmem>>, vector<1x128xf32>
    %22 = vector.broadcast %21 : vector<1x128xf32> to vector<8x128xf32>
    %23 = arith.mulf %20, %22 : vector<8x128xf32>
    %c0_8 = arith.constant 0 : index
    %c0_9 = arith.constant 0 : index
    %24 = vector.load %arg3[%c0_8, %c0_9] : memref<1x128xf32, #tpu.memory_space<vmem>>, vector<1x128xf32>
    %25 = vector.broadcast %24 : vector<1x128xf32> to vector<8x128xf32>
    %26 = arith.addf %23, %25 : vector<8x128xf32>
    %c0_10 = arith.constant 0 : index
    %c0_11 = arith.constant 0 : index
    %27 = vector.load %arg4[%c0_10, %c0_11] : memref<128x128xf32, #tpu.memory_space<vmem>>, vector<128x128xf32>
    %cst_12 = arith.constant dense<0.000000e+00> : vector<8x128xf32>
    %28 = tpu.matmul %26, %27, %cst_12 {dimension_numbers = #tpu.dot_dimension_numbers<[1], [0], [0], [1], [0, 0, 1, 1], [], []>} : vector<8x128xf32>, vector<128x128xf32>, vector<8x128xf32> -> vector<8x128xf32>
    %c0_13 = arith.constant 0 : index
    %c0_14 = arith.constant 0 : index
    %29 = vector.load %arg5[%c0_13, %c0_14] : memref<1x128xf32, #tpu.memory_space<vmem>>, vector<1x128xf32>
    %30 = vector.broadcast %29 : vector<1x128xf32> to vector<8x128xf32>
    %31 = arith.addf %28, %30 : vector<8x128xf32>
    %32 = arith.negf %31 : vector<8x128xf32>
    %33 = math.exp %32 : vector<8x128xf32>
    %cst_15 = arith.constant 1.000000e+00 : f32
    %34 = vector.broadcast %cst_15 : f32 to vector<8x128xf32>
    %35 = arith.addf %34, %33 : vector<8x128xf32>
    %36 = arith.divf %34, %35 : vector<8x128xf32>
    %37 = arith.mulf %31, %36 : vector<8x128xf32>
    %c0_16 = arith.constant 0 : index
    %c0_17 = arith.constant 0 : index
    %38 = vector.load %arg6[%c0_16, %c0_17] : memref<128x128xf32, #tpu.memory_space<vmem>>, vector<128x128xf32>
    %cst_18 = arith.constant dense<0.000000e+00> : vector<8x128xf32>
    %39 = tpu.matmul %37, %38, %cst_18 {dimension_numbers = #tpu.dot_dimension_numbers<[1], [0], [0], [1], [0, 0, 1, 1], [], []>} : vector<8x128xf32>, vector<128x128xf32>, vector<8x128xf32> -> vector<8x128xf32>
    %c0_19 = arith.constant 0 : index
    %c0_20 = arith.constant 0 : index
    %40 = vector.load %arg7[%c0_19, %c0_20] : memref<1x128xf32, #tpu.memory_space<vmem>>, vector<1x128xf32>
    %41 = vector.broadcast %40 : vector<1x128xf32> to vector<8x128xf32>
    %42 = arith.addf %39, %41 : vector<8x128xf32>
    %c0_21 = arith.constant 0 : index
    %c0_22 = arith.constant 0 : index
    %43 = vector.load %arg8[%c0_21, %c0_22] : memref<8x128xf32, #tpu.memory_space<vmem>>, vector<8x128xf32>
    tpu.vector_store %arg8[%c0_21, %c0_22], %42 {strides = array<i32>} : memref<8x128xf32, #tpu.memory_space<vmem>>, vector<8x128xf32>,
    return
  }
  func.func @transform_0(%arg0: i32) -> (i32, i32) {
    %c0_i32 = arith.constant 0 : i32
    %c0_i32_0 = arith.constant 0 : i32
    return %arg0, %c0_i32 : i32, i32
  }
  func.func @transform_1(%arg0: i32) -> (i32, i32) {
    %c0_i32 = arith.constant 0 : i32
    %c0_i32_0 = arith.constant 0 : i32
    %c0_i32_1 = arith.constant 0 : i32
    return %c0_i32, %c0_i32_0 : i32, i32
  }
  func.func @transform_2(%arg0: i32) -> (i32, i32) {
    %c0_i32 = arith.constant 0 : i32
    %c0_i32_0 = arith.constant 0 : i32
    %c0_i32_1 = arith.constant 0 : i32
    return %c0_i32, %c0_i32_0 : i32, i32
  }
  func.func @transform_3(%arg0: i32) -> (i32, i32) {
    %c0_i32 = arith.constant 0 : i32
    %c0_i32_0 = arith.constant 0 : i32
    %c0_i32_1 = arith.constant 0 : i32
    return %c0_i32, %c0_i32_0 : i32, i32
  }
  func.func @transform_4(%arg0: i32) -> (i32, i32) {
    %c0_i32 = arith.constant 0 : i32
    %c0_i32_0 = arith.constant 0 : i32
    %c0_i32_1 = arith.constant 0 : i32
    return %c0_i32, %c0_i32_0 : i32, i32
  }
  func.func @transform_5(%arg0: i32) -> (i32, i32) {
    %c0_i32 = arith.constant 0 : i32
    %c0_i32_0 = arith.constant 0 : i32
    %c0_i32_1 = arith.constant 0 : i32
    return %c0_i32, %c0_i32_0 : i32, i32
  }
  func.func @transform_6(%arg0: i32) -> (i32, i32) {
    %c0_i32 = arith.constant 0 : i32
    %c0_i32_0 = arith.constant 0 : i32
    %c0_i32_1 = arith.constant 0 : i32
    return %c0_i32, %c0_i32_0 : i32, i32
  }
  func.func @transform_7(%arg0: i32) -> (i32, i32) {
    %c0_i32 = arith.constant 0 : i32
    %c0_i32_0 = arith.constant 0 : i32
    return %arg0, %c0_i32 : i32, i32
  }
}

module attributes {stable_mosaic.version = 11 : i64} {
  func.func @adapter_kernel(%arg0: i32, %arg1: memref<8x128xf32, #tpu.memory_space<vmem>>, %arg2: memref<1x128xf32, #tpu.memory_space<vmem>>, %arg3: memref<1x128xf32, #tpu.memory_space<vmem>>, %arg4: memref<128x128xf32, #tpu.memory_space<vmem>>, %arg5: memref<1x128xf32, #tpu.memory_space<vmem>>, %arg6: memref<128x128xf32, #tpu.memory_space<vmem>>, %arg7: memref<1x128xf32, #tpu.memory_space<vmem>>, %arg8: memref<8x128xf32, #tpu.memory_space<vmem>>) attributes {dimension_semantics = [#tpu.dimension_semantics<parallel>], iteration_bounds = array<i64: 2>, scalar_prefetch = 0 : i64, scratch_operands = 0 : i64, tpu.core_type = #tpu.core_type<tc>, window_params = [{transform_indices = @transform_0, window_bounds = array<i64: 8, 128>}, {pipeline_mode = #tpu.pipeline_mode<synchronous>, transform_indices = @transform_1, window_bounds = array<i64: 1, 128>}, {pipeline_mode = #tpu.pipeline_mode<synchronous>, transform_indices = @transform_2, window_bounds = array<i64: 1, 128>}, {pipeline_mode = #tpu.pipeline_mode<synchronous>, transform_indices = @transform_3, window_bounds = array<i64: 128, 128>}, {pipeline_mode = #tpu.pipeline_mode<synchronous>, transform_indices = @transform_4, window_bounds = array<i64: 1, 128>}, {pipeline_mode = #tpu.pipeline_mode<synchronous>, transform_indices = @transform_5, window_bounds = array<i64: 128, 128>}, {pipeline_mode = #tpu.pipeline_mode<synchronous>, transform_indices = @transform_6, window_bounds = array<i64: 1, 128>}, {transform_indices = @transform_7, window_bounds = array<i64: 8, 128>}]} {
    %c0 = arith.constant 0 : index
    %c0_0 = arith.constant 0 : index
    %0 = vector.load %arg1[%c0, %c0_0] : memref<8x128xf32, #tpu.memory_space<vmem>>, vector<8x128xf32>
    %cst = arith.constant dense<0.000000e+00> : vector<8xf32>
    %1 = vector.multi_reduction <add>, %0, %cst [1] : vector<8x128xf32> to vector<8xf32>
    %2 = vector.shape_cast %1 : vector<8xf32> to vector<8x1xf32>
    %cst_1 = arith.constant 3.125000e-02 : f32
    %3 = vector.broadcast %cst_1 : f32 to vector<8x1xf32>
    %4 = arith.mulf %2, %3 : vector<8x1xf32>
    %5 = arith.mulf %0, %0 : vector<8x128xf32>
    %cst_2 = arith.constant dense<0.000000e+00> : vector<8xf32>
    %6 = vector.multi_reduction <add>, %5, %cst_2 [1] : vector<8x128xf32> to vector<8xf32>
    %7 = vector.shape_cast %6 : vector<8xf32> to vector<8x1xf32>
    %cst_3 = arith.constant 3.125000e-02 : f32
    %8 = vector.broadcast %cst_3 : f32 to vector<8x1xf32>
    %9 = arith.mulf %7, %8 : vector<8x1xf32>
    %10 = arith.mulf %4, %4 : vector<8x1xf32>
    %11 = arith.subf %9, %10 : vector<8x1xf32>
    %cst_4 = arith.constant 0.000000e+00 : f32
    %12 = vector.broadcast %cst_4 : f32 to vector<8x1xf32>
    %13 = arith.maximumf %11, %12 : vector<8x1xf32>
    %14 = vector.broadcast %4 : vector<8x1xf32> to vector<8x128xf32>
    %15 = arith.subf %0, %14 : vector<8x128xf32>
    %cst_5 = arith.constant 9.99999974E-6 : f32
    %16 = vector.broadcast %cst_5 : f32 to vector<8x1xf32>
    %17 = arith.addf %13, %16 : vector<8x1xf32>
    %18 = math.rsqrt %17 : vector<8x1xf32>
    %19 = vector.broadcast %18 : vector<8x1xf32> to vector<8x128xf32>
    %20 = arith.mulf %15, %19 : vector<8x128xf32>
    %c0_6 = arith.constant 0 : index
    %c0_7 = arith.constant 0 : index
    %21 = vector.load %arg2[%c0_6, %c0_7] : memref<1x128xf32, #tpu.memory_space<vmem>>, vector<1x128xf32>
    %22 = vector.broadcast %21 : vector<1x128xf32> to vector<8x128xf32>
    %23 = arith.mulf %20, %22 : vector<8x128xf32>
    %c0_8 = arith.constant 0 : index
    %c0_9 = arith.constant 0 : index
    %24 = vector.load %arg3[%c0_8, %c0_9] : memref<1x128xf32, #tpu.memory_space<vmem>>, vector<1x128xf32>
    %25 = vector.broadcast %24 : vector<1x128xf32> to vector<8x128xf32>
    %26 = arith.addf %23, %25 : vector<8x128xf32>
    %c0_10 = arith.constant 0 : index
    %c0_11 = arith.constant 0 : index
    %27 = vector.load %arg4[%c0_10, %c0_11] : memref<128x128xf32, #tpu.memory_space<vmem>>, vector<128x128xf32>
    %cst_12 = arith.constant dense<0.000000e+00> : vector<8x128xf32>
    %28 = tpu.matmul %26, %27, %cst_12 {dimension_numbers = #tpu.dot_dimension_numbers<[1], [0], [0], [1], [0, 0, 1, 1], [], []>} : vector<8x128xf32>, vector<128x128xf32>, vector<8x128xf32> -> vector<8x128xf32>
    %c0_13 = arith.constant 0 : index
    %c0_14 = arith.constant 0 : index
    %29 = vector.load %arg5[%c0_13, %c0_14] : memref<1x128xf32, #tpu.memory_space<vmem>>, vector<1x128xf32>
    %30 = vector.broadcast %29 : vector<1x128xf32> to vector<8x128xf32>
    %31 = arith.addf %28, %30 : vector<8x128xf32>
    %32 = arith.negf %31 : vector<8x128xf32>
    %33 = math.exp %32 : vector<8x128xf32>
    %cst_15 = arith.constant 1.000000e+00 : f32
    %34 = vector.broadcast %cst_15 : f32 to vector<8x128xf32>
    %35 = arith.addf %34, %33 : vector<8x128xf32>
    %36 = arith.divf %34, %35 : vector<8x128xf32>
    %37 = arith.mulf %31, %36 : vector<8x128xf32>
    %c0_16 = arith.constant 0 : index
    %c0_17 = arith.constant 0 : index
    %38 = vector.load %arg6[%c0_16, %c0_17] : memref<128x128xf32, #tpu.memory_space<vmem>>, vector<128x128xf32>
    %cst_18 = arith.constant dense<0.000000e+00> : vector<8x128xf32>
    %39 = tpu.matmul %37, %38, %cst_18 {dimension_numbers = #tpu.dot_dimension_numbers<[1], [0], [0], [1], [0, 0, 1, 1], [], []>} : vector<8x128xf32>, vector<128x128xf32>, vector<8x128xf32> -> vector<8x128xf32>
    %c0_19 = arith.constant 0 : index
    %c0_20 = arith.constant 0 : index
    %40 = vector.load %arg7[%c0_19, %c0_20] : memref<1x128xf32, #tpu.memory_space<vmem>>, vector<1x128xf32>
    %41 = vector.broadcast %40 : vector<1x128xf32> to vector<8x128xf32>
    %42 = arith.addf %39, %41 : vector<8x128xf32>
    %c0_21 = arith.constant 0 : index
    %c0_22 = arith.constant 0 : index
    %43 = vector.load %arg8[%c0_21, %c0_22] : memref<8x128xf32, #tpu.memory_space<vmem>>, vector<8x128xf32>
    tpu.vector_store %arg8[%c0_21, %c0_22], %42 {strides = array<i32>} : memref<8x128xf32, #tpu.memory_space<vmem>>, vector<8x128xf32>,
    return
  }
  func.func @transform_0(%arg0: i32) -> (i32, i32) {
    %c0_i32 = arith.constant 0 : i32
    %c0_i32_0 = arith.constant 0 : i32
    return %arg0, %c0_i32 : i32, i32
  }
  func.func @transform_1(%arg0: i32) -> (i32, i32) {
    %c0_i32 = arith.constant 0 : i32
    %c0_i32_0 = arith.constant 0 : i32
    %c0_i32_1 = arith.constant 0 : i32
    return %c0_i32, %c0_i32_0 : i32, i32
  }
  func.func @transform_2(%arg0: i32) -> (i32, i32) {
    %c0_i32 = arith.constant 0 : i32
    %c0_i32_0 = arith.constant 0 : i32
    %c0_i32_1 = arith.constant 0 : i32
    return %c0_i32, %c0_i32_0 : i32, i32
  }
  func.func @transform_3(%arg0: i32) -> (i32, i32) {
    %c0_i32 = arith.constant 0 : i32
    %c0_i32_0 = arith.constant 0 : i32
    %c0_i32_1 = arith.constant 0 : i32
    return %c0_i32, %c0_i32_0 : i32, i32
  }
  func.func @transform_4(%arg0: i32) -> (i32, i32) {
    %c0_i32 = arith.constant 0 : i32
    %c0_i32_0 = arith.constant 0 : i32
    %c0_i32_1 = arith.constant 0 : i32
    return %c0_i32, %c0_i32_0 : i32, i32
  }
  func.func @transform_5(%arg0: i32) -> (i32, i32) {
    %c0_i32 = arith.constant 0 : i32
    %c0_i32_0 = arith.constant 0 : i32
    %c0_i32_1 = arith.constant 0 : i32
    return %c0_i32, %c0_i32_0 : i32, i32
  }
  func.func @transform_6(%arg0: i32) -> (i32, i32) {
    %c0_i32 = arith.constant 0 : i32
    %c0_i32_0 = arith.constant 0 : i32
    %c0_i32_1 = arith.constant 0 : i32
    return %c0_i32, %c0_i32_0 : i32, i32
  }
  func.func @transform_7(%arg0: i32) -> (i32, i32) {
    %c0_i32 = arith.constant 0 : i32
    %c0_i32_0 = arith.constant 0 : i32
    return %arg0, %c0_i32 : i32, i32
  }
}

</mosaic_0001>

<llo_original>
// kernel: tpu_custom_call.1
$region0: #{tpu_custom_call.1}
  #allocation0 [shape = 'u32[]', space=smem, size = 0x4, offset = 0x4, fixed_abs, tag = 'smem constant byte address 0x4 - core index']
  #allocation1 [shape = 'u32[72,128]{1,0:T(1,128)}', space=vmem, size = 0x9000, scoped, tag = 'internal scratch']
  %s0 = inlined_call_operand.hbm [shape: f32[16,128], index: 0, kind: input, shape index: {}]
  %s1 = inlined_call_operand.hbm [shape: f32[1,128], index: 1, kind: input, shape index: {}]
  %s2 = inlined_call_operand.vmem [shape: f32[1,128], index: 2, kind: input, shape index: {}]
  %s3 = inlined_call_operand.hbm [shape: f32[128,128], index: 3, kind: input, shape index: {}]
  %s4 = inlined_call_operand.vmem [shape: f32[1,128], index: 4, kind: input, shape index: {}]
  %s5 = inlined_call_operand.hbm [shape: f32[128,128], index: 5, kind: input, shape index: {}]
  %s6 = inlined_call_operand.vmem [shape: f32[1,128], index: 6, kind: input, shape index: {}]
  %s7 = inlined_call_operand.hbm [shape: f32[16,128], index: 7, kind: output, shape index: {}]
  %s8 = sld [smem:[#allocation0]]
  $region77: #{tpu_custom_call.1} parent=0
    _
  %s10 = ssub.s32 1, %s8
  %s11 = scalar_select 0, %s10, %s8
  $region1: #{tpu_custom_call.1} parent=0
    #allocation2 [shape = 'u8[8192]{0}', space=vmem, size = 0x2000, scoped, tag = 'input window, operand 0']
    #allocation3 [shape = 's32[2]{0}', space=sflag, size = 0x8, scoped, tag = 'scoped memory for tpu_custom_call.1']
    #allocation4 [shape = 's32[2]{0}', space=sflag, size = 0x8, scoped, tag = 'scoped memory for tpu_custom_call.1']
    #allocation5 [shape = 'u8[512]{0}', space=vmem, size = 0x400, scoped, tag = 'input window, operand 1, single buffered']
    #allocation6 [shape = 's32[1]{0}', space=sflag, size = 0x4, scoped, tag = 'scoped memory for tpu_custom_call.1']
    #allocation7 [shape = 'u8[65536]{0}', space=vmem, size = 0x10000, scoped, tag = 'input window, operand 3, single buffered']
    #allocation8 [shape = 'u8[65536]{0}', space=vmem, size = 0x10000, scoped, tag = 'input window, operand 5, single buffered']
    #allocation9 [shape = 's32[1]{0}', space=sflag, size = 0x4, scoped, tag = 'scoped memory for tpu_custom_call.1']
    #allocation10 [shape = 'u8[8192]{0}', space=vmem, size = 0x2000, scoped, tag = 'output window, operand 0']
    %12 = vsyncpa [#allocation3], 0
    %s13 = scalar_lea.sflag [#allocation3], 1
    %14 = vsyncpa %s13, 0
    %15 = vsyncpa [#allocation6], 0
    %16 = vsyncpa [#allocation9], 0
    %17 = vsyncpa [#allocation4], 0
    %s18 = scalar_lea.sflag [#allocation4], 1
    %19 = vsyncpa %s18, 0
    loop: start=0, step=1, limit=4
    $region2: #{tpu_custom_call.1} parent=1 // loop_pre_header
      _
    $region3: #{tpu_custom_call.1} parent=1 // loop_header
      %s21 = sphi 0, %s25
      %p22 = scmp.ge.s32.totalorder %s21, 4
      %s31 = sphi 0, %s33
      %s34 = sphi 0, %s31
      %s35 = sphi 0, %s34
      %s51 = sphi 0, %s35
      %s55 = sphi 0, %s55
      %s57 = sphi 0, %s55
      %s58 = sphi 0, %s57
      %s72 = sphi 0, %s58
      %s76 = sphi 0, %s76
      %s78 = sphi 0, %s76
      %s79 = sphi 0, %s78
      %s93 = sphi 0, %s79
      %s97 = sphi 0, %s97
      %s99 = sphi 0, %s97
      %s100 = sphi 0, %s99
      %s114 = sphi 0, %s100
      %s118 = sphi 0, %s118
      %s120 = sphi 0, %s118
      %s121 = sphi 0, %s120
      %s135 = sphi 0, %s121
      %s139 = sphi 0, %s139
      %s141 = sphi 0, %s139
      %s142 = sphi 0, %s141
      %s156 = sphi 0, %s142
      %s160 = sphi 0, %s160
      %s162 = sphi 0, %s160
      %s163 = sphi 0, %s162
      %s177 = sphi 0, %s163
      %s183 = sphi 0, %s185
      %s186 = sphi 0, %s183
      %s187 = sphi 0, %s186
      %s203 = sphi 0, %s187
    $region4: #{tpu_custom_call.1} parent=1 // loop_header_branch
      %24 = sbr.rel (%p22) target = $region8
    $region5: #{tpu_custom_call.1} parent=1 // loop_body
      %s26 = ssub.s32 %s21, 1
      %s27 = ssub.s32 %s21, 2
      %s28 = sadd.s32 %s21, 1
      %s29 = ssub.s32 %s21, %s28
      %p30 = scmp.eq.s32.totalorder %s29, 0
      %s32 = sadd.s32 %s31, 1
      %s33 = scalar_select %p30, %s31, %s32
      %p36 = pneg %p30
      %p37 = scmp.eq.s32.totalorder %s21, 1
      %p38 = por %p36, %p37
      %p39 = scmp.ne.s32.totalorder %s31, %s34
      %p40 = scmp.eq.s32.totalorder %s21, 0
      %p41 = por %p39, %p40
      %p42 = scmp.ne.s32.totalorder %s31, %s34
      %p43 = scmp.eq.s32.totalorder %s26, 1
      %p44 = por %p42, %p43
      %p45 = scmp.ne.s32.totalorder %s34, %s35
      %p46 = scmp.eq.s32.totalorder %s26, 0
      %p47 = por %p45, %p46
      %p48 = scmp.ne.s32.totalorder %s34, %s35
      %p49 = scmp.eq.s32.totalorder %s27, 1
      %p50 = por %p48, %p49
      %p52 = scmp.ne.s32.totalorder %s35, %s51
      %p53 = scmp.eq.s32.totalorder %s27, 0
      %p54 = por %p52, %p53
      %s56 = sadd.s32 %s55, 1
      %p59 = scmp.eq.s32.totalorder %s21, 1
      %p60 = scmp.ne.s32.totalorder %s55, %s57
      %p61 = scmp.eq.s32.totalorder %s21, 0
      %p62 = por %p60, %p61
      %p63 = scmp.ne.s32.totalorder %s55, %s57
      %p64 = scmp.eq.s32.totalorder %s26, 1
      %p65 = por %p63, %p64
      %p66 = scmp.ne.s32.totalorder %s57, %s58
      %p67 = scmp.eq.s32.totalorder %s26, 0
      %p68 = por %p66, %p67
      %p69 = scmp.ne.s32.totalorder %s57, %s58
      %p70 = scmp.eq.s32.totalorder %s27, 1
      %p71 = por %p69, %p70
      %p73 = scmp.ne.s32.totalorder %s58, %s72
      %p74 = scmp.eq.s32.totalorder %s27, 0
      %p75 = por %p73, %p74
      %s77 = sadd.s32 %s76, 1
      %p80 = scmp.eq.s32.totalorder %s21, 1
      %p81 = scmp.ne.s32.totalorder %s76, %s78
      %p82 = scmp.eq.s32.totalorder %s21, 0
      %p83 = por %p81, %p82
      %p84 = scmp.ne.s32.totalorder %s76, %s78
      %p85 = scmp.eq.s32.totalorder %s26, 1
      %p86 = por %p84, %p85
      %p87 = scmp.ne.s32.totalorder %s78, %s79
      %p88 = scmp.eq.s32.totalorder %s26, 0
      %p89 = por %p87, %p88
      %p90 = scmp.ne.s32.totalorder %s78, %s79
      %p91 = scmp.eq.s32.totalorder %s27, 1
      %p92 = por %p90, %p91
      %p94 = scmp.ne.s32.totalorder %s79, %s93
      %p95 = scmp.eq.s32.totalorder %s27, 0
      %p96 = por %p94, %p95
      %s98 = sadd.s32 %s97, 1
      %p101 = scmp.eq.s32.totalorder %s21, 1
      %p102 = scmp.ne.s32.totalorder %s97, %s99
      %p103 = scmp.eq.s32.totalorder %s21, 0
      %p104 = por %p102, %p103
      %p105 = scmp.ne.s32.totalorder %s97, %s99
      %p106 = scmp.eq.s32.totalorder %s26, 1
      %p107 = por %p105, %p106
      %p108 = scmp.ne.s32.totalorder %s99, %s100
      %p109 = scmp.eq.s32.totalorder %s26, 0
      %p110 = por %p108, %p109
      %p111 = scmp.ne.s32.totalorder %s99, %s100
      %p112 = scmp.eq.s32.totalorder %s27, 1
      %p113 = por %p111, %p112
      %p115 = scmp.ne.s32.totalorder %s100, %s114
      %p116 = scmp.eq.s32.totalorder %s27, 0
      %p117 = por %p115, %p116
      %s119 = sadd.s32 %s118, 1
      %p122 = scmp.eq.s32.totalorder %s21, 1
      %p123 = scmp.ne.s32.totalorder %s118, %s120
      %p124 = scmp.eq.s32.totalorder %s21, 0
      %p125 = por %p123, %p124
      %p126 = scmp.ne.s32.totalorder %s118, %s120
      %p127 = scmp.eq.s32.totalorder %s26, 1
      %p128 = por %p126, %p127
      %p129 = scmp.ne.s32.totalorder %s120, %s121
      %p130 = scmp.eq.s32.totalorder %s26, 0
      %p131 = por %p129, %p130
      %p132 = scmp.ne.s32.totalorder %s120, %s121
      %p133 = scmp.eq.s32.totalorder %s27, 1
      %p134 = por %p132, %p133
      %p136 = scmp.ne.s32.totalorder %s121, %s135
      %p137 = scmp.eq.s32.totalorder %s27, 0
      %p138 = por %p136, %p137
      %s140 = sadd.s32 %s139, 1
      %p143 = scmp.eq.s32.totalorder %s21, 1
      %p144 = scmp.ne.s32.totalorder %s139, %s141
      %p145 = scmp.eq.s32.totalorder %s21, 0
      %p146 = por %p144, %p145
      %p147 = scmp.ne.s32.totalorder %s139, %s141
      %p148 = scmp.eq.s32.totalorder %s26, 1
      %p149 = por %p147, %p148
      %p150 = scmp.ne.s32.totalorder %s141, %s142
      %p151 = scmp.eq.s32.totalorder %s26, 0
      %p152 = por %p150, %p151
      %p153 = scmp.ne.s32.totalorder %s141, %s142
      %p154 = scmp.eq.s32.totalorder %s27, 1
      %p155 = por %p153, %p154
      %p157 = scmp.ne.s32.totalorder %s142, %s156
      %p158 = scmp.eq.s32.totalorder %s27, 0
      %p159 = por %p157, %p158
      %s161 = sadd.s32 %s160, 1
      %p164 = scmp.eq.s32.totalorder %s21, 1
      %p165 = scmp.ne.s32.totalorder %s160, %s162
      %p166 = scmp.eq.s32.totalorder %s21, 0
      %p167 = por %p165, %p166
      %p168 = scmp.ne.s32.totalorder %s160, %s162
      %p169 = scmp.eq.s32.totalorder %s26, 1
      %p170 = por %p168, %p169
      %p171 = scmp.ne.s32.totalorder %s162, %s163
      %p172 = scmp.eq.s32.totalorder %s26, 0
      %p173 = por %p171, %p172
      %p174 = scmp.ne.s32.totalorder %s162, %s163
      %p175 = scmp.eq.s32.totalorder %s27, 1
      %p176 = por %p174, %p175
      %p178 = scmp.ne.s32.totalorder %s163, %s177
      %p179 = scmp.eq.s32.totalorder %s27, 0
      %p180 = por %p178, %p179
      %s181 = ssub.s32 %s21, %s28
      %p182 = scmp.eq.s32.totalorder %s181, 0
      %s184 = sadd.s32 %s183, 1
      %s185 = scalar_select %p182, %s183, %s184
      %p188 = pneg %p182
      %p189 = scmp.eq.s32.totalorder %s21, 1
      %p190 = por %p188, %p189
      %p191 = scmp.ne.s32.totalorder %s183, %s186
      %p192 = scmp.eq.s32.totalorder %s21, 0
      %p193 = por %p191, %p192
      %p194 = scmp.ne.s32.totalorder %s183, %s186
      %p195 = scmp.eq.s32.totalorder %s26, 1
      %p196 = por %p194, %p195
      %p197 = scmp.ne.s32.totalorder %s186, %s187
      %p198 = scmp.eq.s32.totalorder %s26, 0
      %p199 = por %p197, %p198
      %p200 = scmp.ne.s32.totalorder %s186, %s187
      %p201 = scmp.eq.s32.totalorder %s27, 1
      %p202 = por %p200, %p201
      %p204 = scmp.ne.s32.totalorder %s187, %s203
      %p205 = scmp.eq.s32.totalorder %s27, 0
      %p206 = por %p204, %p205
      %p207 = scmp.le.s32.totalorder 1, %s21
      %p208 = scmp.lt.s32.totalorder %s21, 3
      %p209 = pnand %p207, %p208
      %p210 = pneg %p209
      // Predicated region
      $region9: #{tpu_custom_call.1} parent=5 // pred_check
        _
      $region10: #{tpu_custom_call.1} parent=5 // pred_check_branch
        %212 = sbr.rel (%p209) target = $region12
      $region11: #{tpu_custom_call.1} parent=5 // pred_region
        %s213 = ssub.s32 %s21, 1
        // Predicated region
        $region13: #{tpu_custom_call.1} parent=11 // pred_check
          %p214 = pneg %p68
        $region14: #{tpu_custom_call.1} parent=11 // pred_check_branch
          %216 = sbr.rel (%p214) target = $region16
        $region15: #{tpu_custom_call.1} parent=11 // pred_region
          %218 = vsyncadd [#allocation6], 0
          %s220 = sshll.u32 %s1, 4
          %s221 = int_to_ptr.hbm [resolvable:$true] %s220
          %s222 = sshll.u32 [#allocation5], 4
          %s223 = int_to_ptr.vmem [resolvable:$true] %s222
          %225 = dma.hbm_to_vmem [thread:$0]  %s221, 16, %s223, [#allocation6]
        $region16: #{tpu_custom_call.1} parent=11 // pred_fallthru
          _
        // Predicated region
        $region17: #{tpu_custom_call.1} parent=11 // pred_check
          %p226 = pneg %p89
        $region18: #{tpu_custom_call.1} parent=11 // pred_check_branch
          %228 = sbr.rel (%p226) target = $region20
        $region19: #{tpu_custom_call.1} parent=11 // pred_region
          _
        $region20: #{tpu_custom_call.1} parent=11 // pred_fallthru
          _
        // Predicated region
        $region21: #{tpu_custom_call.1} parent=11 // pred_check
          %p229 = pneg %p110
        $region22: #{tpu_custom_call.1} parent=11 // pred_check_branch
          %231 = sbr.rel (%p229) target = $region24
        $region23: #{tpu_custom_call.1} parent=11 // pred_region
          %233 = vsyncadd [#allocation6], 0
          %s234 = sshll.u32 %s3, 4
          %s235 = int_to_ptr.hbm [resolvable:$true] %s234
          %s236 = sshll.u32 [#allocation7], 4
          %s237 = int_to_ptr.vmem [resolvable:$true] %s236
          %242 = dma.hbm_to_vmem [thread:$0]  %s235, 2048, %s237, [#allocation6], 128, 128, 8
        $region24: #{tpu_custom_call.1} parent=11 // pred_fallthru
          _
        // Predicated region
        $region25: #{tpu_custom_call.1} parent=11 // pred_check
          %p243 = pneg %p131
        $region26: #{tpu_custom_call.1} parent=11 // pred_check_branch
          %245 = sbr.rel (%p243) target = $region28
        $region27: #{tpu_custom_call.1} parent=11 // pred_region
          _
        $region28: #{tpu_custom_call.1} parent=11 // pred_fallthru
          _
        // Predicated region
        $region29: #{tpu_custom_call.1} parent=11 // pred_check
          %p246 = pneg %p152
        $region30: #{tpu_custom_call.1} parent=11 // pred_check_branch
          %248 = sbr.rel (%p246) target = $region32
        $region31: #{tpu_custom_call.1} parent=11 // pred_region
          %250 = vsyncadd [#allocation9], 0
          %s251 = sshll.u32 %s5, 4
          %s252 = int_to_ptr.hbm [resolvable:$true] %s251
          %s253 = sshll.u32 [#allocation8], 4
          %s254 = int_to_ptr.vmem [resolvable:$true] %s253
          %259 = dma.hbm_to_vmem [thread:$0]  %s252, 2048, %s254, [#allocation9], 128, 128, 8
        $region32: #{tpu_custom_call.1} parent=11 // pred_fallthru
          _
        // Predicated region
        $region33: #{tpu_custom_call.1} parent=11 // pred_check
          %p260 = pneg %p173
        $region34: #{tpu_custom_call.1} parent=11 // pred_check_branch
          %262 = sbr.rel (%p260) target = $region36
        $region35: #{tpu_custom_call.1} parent=11 // pred_region
          _
        $region36: #{tpu_custom_call.1} parent=11 // pred_fallthru
          _
      $region12: #{tpu_custom_call.1} parent=5 // pred_fallthru
        _
      %p263 = scmp.lt.s32.totalorder %s21, 2
      // Predicated region
      $region37: #{tpu_custom_call.1} parent=5 // pred_check
        %p264 = pneg %p263
      $region38: #{tpu_custom_call.1} parent=5 // pred_check_branch
        %266 = sbr.rel (%p264) target = $region40
      $region39: #{tpu_custom_call.1} parent=5 // pred_region
        // Predicated region
        $region41: #{tpu_custom_call.1} parent=39 // pred_check
          %p267 = pneg %p41
        $region42: #{tpu_custom_call.1} parent=39 // pred_check_branch
          %269 = sbr.rel (%p267) target = $region44
        $region43: #{tpu_custom_call.1} parent=39 // pred_region
          %s270 = sand.u32 %s31, 1
          %s271 = scalar_lea.sflag [#allocation3], %s270
          %s272 = sand.u32 %s31, 1
          %s273 = smul.addr %s272, 8
          %s274 = scalar_lea.vmem [#allocation2], %s273
          %276 = vsyncadd %s271, 0
          %s277 = smul.addr %s21, 8
          %s278 = scalar_lea.hbm %s0, %s277
          %s280 = sshll.u32 %s278, 4
          %s281 = int_to_ptr.hbm [resolvable:$true] %s280
          %s282 = sshll.u32 %s274, 4
          %s283 = int_to_ptr.vmem [resolvable:$true] %s282
          %285 = dma.hbm_to_vmem [thread:$0]  %s281, 128, %s283, %s271
        $region44: #{tpu_custom_call.1} parent=39 // pred_fallthru
          _
      $region40: #{tpu_custom_call.1} parent=5 // pred_fallthru
        _
      %p286 = scmp.le.s32.totalorder 1, %s21
      %p287 = scmp.lt.s32.totalorder %s21, 3
      %p288 = pnand %p286, %p287
      %p289 = pneg %p288
      // Predicated region
      $region45: #{tpu_custom_call.1} parent=5 // pred_check
        _
      $region46: #{tpu_custom_call.1} parent=5 // pred_check_branch
        %291 = sbr.rel (%p288) target = $region48
      $region47: #{tpu_custom_call.1} parent=5 // pred_region
        %s292 = ssub.s32 %s21, 1
        %s293 = sand.u32 %s34, 1
        %s294 = scalar_lea.sflag [#allocation3], %s293
        %s295 = sand.u32 %s34, 1
        %s296 = smul.addr %s295, 8
        %s297 = scalar_lea.vmem [#allocation2], %s296
        // Predicated region
        $region49: #{tpu_custom_call.1} parent=47 // pred_check
          %p298 = pneg %p47
        $region50: #{tpu_custom_call.1} parent=47 // pred_check_branch
          %300 = sbr.rel (%p298) target = $region52
        $region51: #{tpu_custom_call.1} parent=47 // pred_region
          %302 = dma.done %s294, 128
        $region52: #{tpu_custom_call.1} parent=47 // pred_fallthru
          _
        // Predicated region
        $region53: #{tpu_custom_call.1} parent=47 // pred_check
          %p303 = pneg %p68
        $region54: #{tpu_custom_call.1} parent=47 // pred_check_branch
          %305 = sbr.rel (%p303) target = $region56
        $region55: #{tpu_custom_call.1} parent=47 // pred_region
          %307 = dma.done [#allocation6], 16
        $region56: #{tpu_custom_call.1} parent=47 // pred_fallthru
          _
        // Predicated region
        $region57: #{tpu_custom_call.1} parent=47 // pred_check
          %p308 = pneg %p110
        $region58: #{tpu_custom_call.1} parent=47 // pred_check_branch
          %310 = sbr.rel (%p308) target = $region60
        $region59: #{tpu_custom_call.1} parent=47 // pred_region
          %312 = dma.done [#allocation6], 2048
        $region60: #{tpu_custom_call.1} parent=47 // pred_fallthru
          _
        // Predicated region
        $region61: #{tpu_custom_call.1} parent=47 // pred_check
          %p313 = pneg %p152
        $region62: #{tpu_custom_call.1} parent=47 // pred_check_branch
          %315 = sbr.rel (%p313) target = $region64
        $region63: #{tpu_custom_call.1} parent=47 // pred_region
          %317 = dma.done [#allocation9], 2048
        $region64: #{tpu_custom_call.1} parent=47 // pred_fallthru
          _
        %s318 = sand.u32 %s34, 1
        %s319 = scalar_lea.sflag [#allocation3], %s318
        %s320 = sand.u32 %s34, 1
        %s321 = smul.addr %s320, 8
        %s322 = scalar_lea.vmem [#allocation2], %s321
        %p323 = pneg %p47
        %p324 = pneg %p44
        %p325 = pneg %p68
        %p326 = pneg %p65
        %p327 = pneg %p89
        %p328 = pneg %p86
        %p329 = pneg %p110
        %p330 = pneg %p107
        %p331 = pneg %p131
        %p332 = pneg %p128
        %p333 = pneg %p152
        %p334 = pneg %p149
        %p335 = pneg %p173
        %p336 = pneg %p170
        %p337 = pneg %p199
        %p338 = pneg %p196
        %s339 = sand.u32 %s186, 1
        %s340 = scalar_lea.sflag [#allocation4], %s339
        %s341 = sand.u32 %s186, 1
        %s342 = smul.addr %s341, 8
        %s343 = scalar_lea.vmem [#allocation10], %s342
        %v344 = vld [vmem:[%s297] sm:$0xff]
        %345 = vadd.xlane.f32.xlu0 %v344
        %v346 = vpop.xlane.xlu0 %345
        %v347 = vmul.f32 %v346, 0.03125
        %v348 = vmul.f32 %v344, %v344
        %349 = vadd.xlane.f32.xlu0 %v348
        %v350 = vpop.xlane.xlu0 %349
        %v351 = vmul.f32 %v350, 0.03125
        %v352 = vmul.f32 %v347, %v347
        %v353 = vsub.f32 %v351, %v352
        %v354 = vmax.f32 %v353, 0.0
        %v355 = vsub.f32 %v344, %v347
        %v356 = vadd.f32 %v354, 1e-05
        %v357 = vrsqrt.pop %v356
        %v358 = vmul.f32 %v357, %v356
        %v359 = vmul.f32 %v358, %v357
        %v360 = vmul.f32 0.5, %v359
        %v361 = vsub.f32 1.5, %v360
        %v362 = vmul.f32 %v357, %v361
        %vm363 = vweird.f32 %v356
        %vm364 = vweird.f32 %v357
        %vm365 = vmor %vm363, %vm364
        %v366 = vsel %vm365, %v357, %v362
        %v367 = vmul.f32 %v355, %v366
        %v368 = vld [vmem:[#allocation5] sm:$0x1]
        %v370 = vperm.slane %v368, 0
        %v372 = vmul.f32 %v367, %v370
        %v373 = vld [vmem:[%s2] sm:$0x1]
        %v375 = vperm.slane %v373, 0
        %v377 = vadd.f32 %v372, %v375
        %v378 = vld [vmem:[#allocation7] sm:$0xff]
        %v379 = vld [vmem:[#allocation7 + $0x8] sm:$0xff]
        %v380 = vld [vmem:[#allocation7 + $0x10] sm:$0xff]
        %v381 = vld [vmem:[#allocation7 + $0x18] sm:$0xff]
        %v382 = vld [vmem:[#allocation7 + $0x20] sm:$0xff]
        %v383 = vld [vmem:[#allocation7 + $0x28] sm:$0xff]
        %v384 = vld [vmem:[#allocation7 + $0x30] sm:$0xff]
        %v385 = vld [vmem:[#allocation7 + $0x38] sm:$0xff]
        %v386 = vld [vmem:[#allocation7 + $0x40] sm:$0xff]
        %v387 = vld [vmem:[#allocation7 + $0x48] sm:$0xff]
        %v388 = vld [vmem:[#allocation7 + $0x50] sm:$0xff]
        %v389 = vld [vmem:[#allocation7 + $0x58] sm:$0xff]
        %v390 = vld [vmem:[#allocation7 + $0x60] sm:$0xff]
        %v391 = vld [vmem:[#allocation7 + $0x68] sm:$0xff]
        %v392 = vld [vmem:[#allocation7 + $0x70] sm:$0xff]
        %v393 = vld [vmem:[#allocation7 + $0x78] sm:$0xff]
        %v394 = vld [vmem:[%s4] sm:$0x1]
        %v396 = vperm.slane %v394, 0
        %398 = vmatpush.msra.mxu0 %v393
        %399 = vmatpush.msra.mxu0 %v392
        %400 = vmatpush.msra.mxu0 %v391
        %401 = vmatpush.msra.mxu0 %v390
        %402 = vmatpush.msra.mxu0 %v389
        %403 = vmatpush.msra.mxu0 %v388
        %404 = vmatpush.msra.mxu0 %v387
        %405 = vmatpush.msra.mxu0 %v386
        %406 = vmatpush.msra.mxu0 %v385
        %407 = vmatpush.msra.mxu0 %v384
        %408 = vmatpush.msra.mxu0 %v383
        %409 = vmatpush.msra.mxu0 %v382
        %410 = vmatpush.msra.mxu0 %v381
        %411 = vmatpush.msra.mxu0 %v380
        %412 = vmatpush.msra.mxu0 %v379
        %413 = vmatpush.msra.mxu0 %v378
        %414 = vmatmul.f32.gmra.mxu0 %v377
        %v415 = vpop.f32.mrf.mxu0
        %v416 = vadd.f32 %v396, %v415
        %417 = vdwg.mxu0
        %v418 = vxor.u32 %v416, 2147483648
        %v419 = vmul.f32 %v418, 1.442695
        %v420 = vpow.pop %v419
        %v421 = vadd.f32 %v420, 1.0
        %v422 = vrcp.pop %v421
        %v423 = vmul.f32 %v421, %v422
        %v424 = vsub.f32 1.0, %v423
        %v425 = vmul.f32 %v422, %v424
        %v426 = vadd.f32 %v422, %v425
        %vm427 = vweird.f32 %v421
        %vm428 = vweird.f32 %v422
        %vm429 = vmor %vm427, %vm428
        %v430 = vsel %vm429, %v422, %v426
        %v431 = vand.u32 2147483647, %v421
        %vm432 = vcmp.eq.f32.partialorder %v431, 8.507059e+37
        %v433 = vand.u32 %v421, 2147483648
        %v434 = vor.u32 1.1754944e-38, %v433
        %v435 = vsel %vm432, %v434, %v430
        %v436 = vmul.f32 1.0, %v435
        %v437 = vmul.f32 %v416, %v436
        %v438 = vld [vmem:[#allocation8] sm:$0xff]
        %v439 = vld [vmem:[#allocation8 + $0x8] sm:$0xff]
        %v440 = vld [vmem:[#allocation8 + $0x10] sm:$0xff]
        %v441 = vld [vmem:[#allocation8 + $0x18] sm:$0xff]
        %v442 = vld [vmem:[#allocation8 + $0x20] sm:$0xff]
        %v443 = vld [vmem:[#allocation8 + $0x28] sm:$0xff]
        %v444 = vld [vmem:[#allocation8 + $0x30] sm:$0xff]
        %v445 = vld [vmem:[#allocation8 + $0x38] sm:$0xff]
        %v446 = vld [vmem:[#allocation8 + $0x40] sm:$0xff]
        %v447 = vld [vmem:[#allocation8 + $0x48] sm:$0xff]
        %v448 = vld [vmem:[#allocation8 + $0x50] sm:$0xff]
        %v449 = vld [vmem:[#allocation8 + $0x58] sm:$0xff]
        %v450 = vld [vmem:[#allocation8 + $0x60] sm:$0xff]
        %v451 = vld [vmem:[#allocation8 + $0x68] sm:$0xff]
        %v452 = vld [vmem:[#allocation8 + $0x70] sm:$0xff]
        %v453 = vld [vmem:[#allocation8 + $0x78] sm:$0xff]
        %v454 = vld [vmem:[%s6] sm:$0x1]
        %v456 = vperm.slane %v454, 0
        %458 = vmatpush.msra.mxu0 %v453
        %459 = vmatpush.msra.mxu0 %v452
        %460 = vmatpush.msra.mxu0 %v451
        %461 = vmatpush.msra.mxu0 %v450
        %462 = vmatpush.msra.mxu0 %v449
        %463 = vmatpush.msra.mxu0 %v448
        %464 = vmatpush.msra.mxu0 %v447
        %465 = vmatpush.msra.mxu0 %v446
        %466 = vmatpush.msra.mxu0 %v445
        %467 = vmatpush.msra.mxu0 %v444
        %468 = vmatpush.msra.mxu0 %v443
        %469 = vmatpush.msra.mxu0 %v442
        %470 = vmatpush.msra.mxu0 %v441
        %471 = vmatpush.msra.mxu0 %v440
        %472 = vmatpush.msra.mxu0 %v439
        %473 = vmatpush.msra.mxu0 %v438
        %474 = vmatmul.f32.gmra.mxu0 %v437
        %v475 = vpop.f32.mrf.mxu0
        %v476 = vadd.f32 %v456, %v475
        %477 = vdwg.mxu0
        %478 = vst [vmem:[%s343] sm:$0xff] %v476
        %s479 = sand.u32 %s186, 1
        %s480 = scalar_lea.sflag [#allocation4], %s479
        %s481 = sand.u32 %s186, 1
        %s482 = smul.addr %s481, 8
        %s483 = scalar_lea.vmem [#allocation10], %s482
        // Predicated region
        $region65: #{tpu_custom_call.1} parent=47 // pred_check
          %p484 = pneg %p196
        $region66: #{tpu_custom_call.1} parent=47 // pred_check_branch
          %486 = sbr.rel (%p484) target = $region68
        $region67: #{tpu_custom_call.1} parent=47 // pred_region
          %488 = vsyncadd %s480, 0
          %s489 = smul.addr %s26, 8
          %s490 = scalar_lea.hbm %s7, %s489
          %s492 = sshll.u32 %s483, 4
          %s493 = int_to_ptr.vmem [resolvable:$true] %s492
          %s494 = sshll.u32 %s490, 4
          %s495 = int_to_ptr.hbm [resolvable:$true] %s494
          %497 = dma.vmem_to_hbm [thread:$0]  %s493, 128, %s495, %s480
        $region68: #{tpu_custom_call.1} parent=47 // pred_fallthru
          _
      $region48: #{tpu_custom_call.1} parent=5 // pred_fallthru
        _
      %p498 = scmp.le.s32.totalorder 2, %s21
      // Predicated region
      $region69: #{tpu_custom_call.1} parent=5 // pred_check
        %p499 = pneg %p498
      $region70: #{tpu_custom_call.1} parent=5 // pred_check_branch
        %501 = sbr.rel (%p499) target = $region72
      $region71: #{tpu_custom_call.1} parent=5 // pred_region
        %s502 = ssub.s32 %s21, 2
        // Predicated region
        $region73: #{tpu_custom_call.1} parent=71 // pred_check
          %p503 = pneg %p202
        $region74: #{tpu_custom_call.1} parent=71 // pred_check_branch
          %505 = sbr.rel (%p503) target = $region76
        $region75: #{tpu_custom_call.1} parent=71 // pred_region
          %s506 = sand.u32 %s187, 1
          %s507 = scalar_lea.sflag [#allocation4], %s506
          %s508 = sand.u32 %s187, 1
          %s509 = smul.addr %s508, 8
          %s510 = scalar_lea.vmem [#allocation10], %s509
          %512 = dma.done %s507, 128
        $region76: #{tpu_custom_call.1} parent=71 // pred_fallthru
          _
      $region72: #{tpu_custom_call.1} parent=5 // pred_fallthru
        _
    $region6: #{tpu_custom_call.1} parent=1 // loop_footer
      %s25 = sadd.s32 1, %s21
    $region7: #{tpu_custom_call.1} parent=1 // loop_footer_branch
      %20 = sbr.rel target = $region3
    $region8: #{tpu_custom_call.1} parent=1 // loop_exit
      _
    %513 = vsyncpa [#allocation3], 1
    %s514 = scalar_lea.sflag [#allocation3], 1
    %515 = vsyncpa %s514, 1
    %516 = vsyncpa [#allocation6], 1
    %517 = vsyncpa [#allocation9], 1
    %518 = vsyncpa [#allocation4], 1
    %s519 = scalar_lea.sflag [#allocation4], 1
    %520 = vsyncpa %s519, 1

// kernel: tpu_custom_call.1
$region0: #{tpu_custom_call.1}
  #allocation0 [shape = 'u32[]', space=smem, size = 0x4, offset = 0x4, fixed_abs, tag = 'smem constant byte address 0x4 - core index']
  #allocation1 [shape = 'u32[72,128]{1,0:T(1,128)}', space=vmem, size = 0x9000, scoped, tag = 'internal scratch']
  %s0 = inlined_call_operand.hbm [shape: f32[16,128], index: 0, kind: input, shape index: {}]
  %s1 = inlined_call_operand.hbm [shape: f32[1,128], index: 1, kind: input, shape index: {}]
  %s2 = inlined_call_operand.vmem [shape: f32[1,128], index: 2, kind: input, shape index: {}]
  %s3 = inlined_call_operand.hbm [shape: f32[128,128], index: 3, kind: input, shape index: {}]
  %s4 = inlined_call_operand.vmem [shape: f32[1,128], index: 4, kind: input, shape index: {}]
  %s5 = inlined_call_operand.hbm [shape: f32[128,128], index: 5, kind: input, shape index: {}]
  %s6 = inlined_call_operand.vmem [shape: f32[1,128], index: 6, kind: input, shape index: {}]
  %s7 = inlined_call_operand.hbm [shape: f32[16,128], index: 7, kind: output, shape index: {}]
  %s8 = sld [smem:[#allocation0]]
  $region77: #{tpu_custom_call.1} parent=0
    _
  %s10 = ssub.s32 1, %s8
  %s11 = scalar_select 0, %s10, %s8
  $region1: #{tpu_custom_call.1} parent=0
    #allocation2 [shape = 'u8[8192]{0}', space=vmem, size = 0x2000, scoped, tag = 'input window, operand 0']
    #allocation3 [shape = 's32[2]{0}', space=sflag, size = 0x8, scoped, tag = 'scoped memory for tpu_custom_call.1']
    #allocation4 [shape = 's32[2]{0}', space=sflag, size = 0x8, scoped, tag = 'scoped memory for tpu_custom_call.1']
    #allocation5 [shape = 'u8[512]{0}', space=vmem, size = 0x400, scoped, tag = 'input window, operand 1, single buffered']
    #allocation6 [shape = 's32[1]{0}', space=sflag, size = 0x4, scoped, tag = 'scoped memory for tpu_custom_call.1']
    #allocation7 [shape = 'u8[65536]{0}', space=vmem, size = 0x10000, scoped, tag = 'input window, operand 3, single buffered']
    #allocation8 [shape = 'u8[65536]{0}', space=vmem, size = 0x10000, scoped, tag = 'input window, operand 5, single buffered']
    #allocation9 [shape = 's32[1]{0}', space=sflag, size = 0x4, scoped, tag = 'scoped memory for tpu_custom_call.1']
    #allocation10 [shape = 'u8[8192]{0}', space=vmem, size = 0x2000, scoped, tag = 'output window, operand 0']
    %12 = vsyncpa [#allocation3], 0
    %s13 = scalar_lea.sflag [#allocation3], 1
    %14 = vsyncpa %s13, 0
    %15 = vsyncpa [#allocation6], 0
    %16 = vsyncpa [#allocation9], 0
    %17 = vsyncpa [#allocation4], 0
    %s18 = scalar_lea.sflag [#allocation4], 1
    %19 = vsyncpa %s18, 0
    loop: start=0, step=1, limit=4
    $region2: #{tpu_custom_call.1} parent=1 // loop_pre_header
      _
    $region3: #{tpu_custom_call.1} parent=1 // loop_header
      %s21 = sphi 0, %s25
      %p22 = scmp.ge.s32.totalorder %s21, 4
      %s31 = sphi 0, %s33
      %s34 = sphi 0, %s31
      %s35 = sphi 0, %s34
      %s51 = sphi 0, %s35
      %s55 = sphi 0, %s55
      %s57 = sphi 0, %s55
      %s58 = sphi 0, %s57
      %s72 = sphi 0, %s58
      %s76 = sphi 0, %s76
      %s78 = sphi 0, %s76
      %s79 = sphi 0, %s78
      %s93 = sphi 0, %s79
      %s97 = sphi 0, %s97
      %s99 = sphi 0, %s97
      %s100 = sphi 0, %s99
      %s114 = sphi 0, %s100
      %s118 = sphi 0, %s118
      %s120 = sphi 0, %s118
      %s121 = sphi 0, %s120
      %s135 = sphi 0, %s121
      %s139 = sphi 0, %s139
      %s141 = sphi 0, %s139
      %s142 = sphi 0, %s141
      %s156 = sphi 0, %s142
      %s160 = sphi 0, %s160
      %s162 = sphi 0, %s160
      %s163 = sphi 0, %s162
      %s177 = sphi 0, %s163
      %s183 = sphi 0, %s185
      %s186 = sphi 0, %s183
      %s187 = sphi 0, %s186
      %s203 = sphi 0, %s187
    $region4: #{tpu_custom_call.1} parent=1 // loop_header_branch
      %24 = sbr.rel (%p22) target = $region8
    $region5: #{tpu_custom_call.1} parent=1 // loop_body
      %s26 = ssub.s32 %s21, 1
      %s27 = ssub.s32 %s21, 2
      %s28 = sadd.s32 %s21, 1
      %s29 = ssub.s32 %s21, %s28
      %p30 = scmp.eq.s32.totalorder %s29, 0
      %s32 = sadd.s32 %s31, 1
      %s33 = scalar_select %p30, %s31, %s32
      %p36 = pneg %p30
      %p37 = scmp.eq.s32.totalorder %s21, 1
      %p38 = por %p36, %p37
      %p39 = scmp.ne.s32.totalorder %s31, %s34
      %p40 = scmp.eq.s32.totalorder %s21, 0
      %p41 = por %p39, %p40
      %p42 = scmp.ne.s32.totalorder %s31, %s34
      %p43 = scmp.eq.s32.totalorder %s26, 1
      %p44 = por %p42, %p43
      %p45 = scmp.ne.s32.totalorder %s34, %s35
      %p46 = scmp.eq.s32.totalorder %s26, 0
      %p47 = por %p45, %p46
      %p48 = scmp.ne.s32.totalorder %s34, %s35
      %p49 = scmp.eq.s32.totalorder %s27, 1
      %p50 = por %p48, %p49
      %p52 = scmp.ne.s32.totalorder %s35, %s51
      %p53 = scmp.eq.s32.totalorder %s27, 0
      %p54 = por %p52, %p53
      %s56 = sadd.s32 %s55, 1
      %p59 = scmp.eq.s32.totalorder %s21, 1
      %p60 = scmp.ne.s32.totalorder %s55, %s57
      %p61 = scmp.eq.s32.totalorder %s21, 0
      %p62 = por %p60, %p61
      %p63 = scmp.ne.s32.totalorder %s55, %s57
      %p64 = scmp.eq.s32.totalorder %s26, 1
      %p65 = por %p63, %p64
      %p66 = scmp.ne.s32.totalorder %s57, %s58
      %p67 = scmp.eq.s32.totalorder %s26, 0
      %p68 = por %p66, %p67
      %p69 = scmp.ne.s32.totalorder %s57, %s58
      %p70 = scmp.eq.s32.totalorder %s27, 1
      %p71 = por %p69, %p70
      %p73 = scmp.ne.s32.totalorder %s58, %s72
      %p74 = scmp.eq.s32.totalorder %s27, 0
      %p75 = por %p73, %p74
      %s77 = sadd.s32 %s76, 1
      %p80 = scmp.eq.s32.totalorder %s21, 1
      %p81 = scmp.ne.s32.totalorder %s76, %s78
      %p82 = scmp.eq.s32.totalorder %s21, 0
      %p83 = por %p81, %p82
      %p84 = scmp.ne.s32.totalorder %s76, %s78
      %p85 = scmp.eq.s32.totalorder %s26, 1
      %p86 = por %p84, %p85
      %p87 = scmp.ne.s32.totalorder %s78, %s79
      %p88 = scmp.eq.s32.totalorder %s26, 0
      %p89 = por %p87, %p88
      %p90 = scmp.ne.s32.totalorder %s78, %s79
      %p91 = scmp.eq.s32.totalorder %s27, 1
      %p92 = por %p90, %p91
      %p94 = scmp.ne.s32.totalorder %s79, %s93
      %p95 = scmp.eq.s32.totalorder %s27, 0
      %p96 = por %p94, %p95
      %s98 = sadd.s32 %s97, 1
      %p101 = scmp.eq.s32.totalorder %s21, 1
      %p102 = scmp.ne.s32.totalorder %s97, %s99
      %p103 = scmp.eq.s32.totalorder %s21, 0
      %p104 = por %p102, %p103
      %p105 = scmp.ne.s32.totalorder %s97, %s99
      %p106 = scmp.eq.s32.totalorder %s26, 1
      %p107 = por %p105, %p106
      %p108 = scmp.ne.s32.totalorder %s99, %s100
      %p109 = scmp.eq.s32.totalorder %s26, 0
      %p110 = por %p108, %p109
      %p111 = scmp.ne.s32.totalorder %s99, %s100
      %p112 = scmp.eq.s32.totalorder %s27, 1
      %p113 = por %p111, %p112
      %p115 = scmp.ne.s32.totalorder %s100, %s114
      %p116 = scmp.eq.s32.totalorder %s27, 0
      %p117 = por %p115, %p116
      %s119 = sadd.s32 %s118, 1
      %p122 = scmp.eq.s32.totalorder %s21, 1
      %p123 = scmp.ne.s32.totalorder %s118, %s120
      %p124 = scmp.eq.s32.totalorder %s21, 0
      %p125 = por %p123, %p124
      %p126 = scmp.ne.s32.totalorder %s118, %s120
      %p127 = scmp.eq.s32.totalorder %s26, 1
      %p128 = por %p126, %p127
      %p129 = scmp.ne.s32.totalorder %s120, %s121
      %p130 = scmp.eq.s32.totalorder %s26, 0
      %p131 = por %p129, %p130
      %p132 = scmp.ne.s32.totalorder %s120, %s121
      %p133 = scmp.eq.s32.totalorder %s27, 1
      %p134 = por %p132, %p133
      %p136 = scmp.ne.s32.totalorder %s121, %s135
      %p137 = scmp.eq.s32.totalorder %s27, 0
      %p138 = por %p136, %p137
      %s140 = sadd.s32 %s139, 1
      %p143 = scmp.eq.s32.totalorder %s21, 1
      %p144 = scmp.ne.s32.totalorder %s139, %s141
      %p145 = scmp.eq.s32.totalorder %s21, 0
      %p146 = por %p144, %p145
      %p147 = scmp.ne.s32.totalorder %s139, %s141
      %p148 = scmp.eq.s32.totalorder %s26, 1
      %p149 = por %p147, %p148
      %p150 = scmp.ne.s32.totalorder %s141, %s142
      %p151 = scmp.eq.s32.totalorder %s26, 0
      %p152 = por %p150, %p151
      %p153 = scmp.ne.s32.totalorder %s141, %s142
      %p154 = scmp.eq.s32.totalorder %s27, 1
      %p155 = por %p153, %p154
      %p157 = scmp.ne.s32.totalorder %s142, %s156
      %p158 = scmp.eq.s32.totalorder %s27, 0
      %p159 = por %p157, %p158
      %s161 = sadd.s32 %s160, 1
      %p164 = scmp.eq.s32.totalorder %s21, 1
      %p165 = scmp.ne.s32.totalorder %s160, %s162
      %p166 = scmp.eq.s32.totalorder %s21, 0
      %p167 = por %p165, %p166
      %p168 = scmp.ne.s32.totalorder %s160, %s162
      %p169 = scmp.eq.s32.totalorder %s26, 1
      %p170 = por %p168, %p169
      %p171 = scmp.ne.s32.totalorder %s162, %s163
      %p172 = scmp.eq.s32.totalorder %s26, 0
      %p173 = por %p171, %p172
      %p174 = scmp.ne.s32.totalorder %s162, %s163
      %p175 = scmp.eq.s32.totalorder %s27, 1
      %p176 = por %p174, %p175
      %p178 = scmp.ne.s32.totalorder %s163, %s177
      %p179 = scmp.eq.s32.totalorder %s27, 0
      %p180 = por %p178, %p179
      %s181 = ssub.s32 %s21, %s28
      %p182 = scmp.eq.s32.totalorder %s181, 0
      %s184 = sadd.s32 %s183, 1
      %s185 = scalar_select %p182, %s183, %s184
      %p188 = pneg %p182
      %p189 = scmp.eq.s32.totalorder %s21, 1
      %p190 = por %p188, %p189
      %p191 = scmp.ne.s32.totalorder %s183, %s186
      %p192 = scmp.eq.s32.totalorder %s21, 0
      %p193 = por %p191, %p192
      %p194 = scmp.ne.s32.totalorder %s183, %s186
      %p195 = scmp.eq.s32.totalorder %s26, 1
      %p196 = por %p194, %p195
      %p197 = scmp.ne.s32.totalorder %s186, %s187
      %p198 = scmp.eq.s32.totalorder %s26, 0
      %p199 = por %p197, %p198
      %p200 = scmp.ne.s32.totalorder %s186, %s187
      %p201 = scmp.eq.s32.totalorder %s27, 1
      %p202 = por %p200, %p201
      %p204 = scmp.ne.s32.totalorder %s187, %s203
      %p205 = scmp.eq.s32.totalorder %s27, 0
      %p206 = por %p204, %p205
      %p207 = scmp.le.s32.totalorder 1, %s21
      %p208 = scmp.lt.s32.totalorder %s21, 3
      %p209 = pnand %p207, %p208
      %p210 = pneg %p209
      // Predicated region
      $region9: #{tpu_custom_call.1} parent=5 // pred_check
        _
      $region10: #{tpu_custom_call.1} parent=5 // pred_check_branch
        %212 = sbr.rel (%p209) target = $region12
      $region11: #{tpu_custom_call.1} parent=5 // pred_region
        %s213 = ssub.s32 %s21, 1
        // Predicated region
        $region13: #{tpu_custom_call.1} parent=11 // pred_check
          %p214 = pneg %p68
        $region14: #{tpu_custom_call.1} parent=11 // pred_check_branch
          %216 = sbr.rel (%p214) target = $region16
        $region15: #{tpu_custom_call.1} parent=11 // pred_region
          %218 = vsyncadd [#allocation6], 0
          %s220 = sshll.u32 %s1, 4
          %s221 = int_to_ptr.hbm [resolvable:$true] %s220
          %s222 = sshll.u32 [#allocation5], 4
          %s223 = int_to_ptr.vmem [resolvable:$true] %s222
          %225 = dma.hbm_to_vmem [thread:$0]  %s221, 16, %s223, [#allocation6]
        $region16: #{tpu_custom_call.1} parent=11 // pred_fallthru
          _
        // Predicated region
        $region17: #{tpu_custom_call.1} parent=11 // pred_check
          %p226 = pneg %p89
        $region18: #{tpu_custom_call.1} parent=11 // pred_check_branch
          %228 = sbr.rel (%p226) target = $region20
        $region19: #{tpu_custom_call.1} parent=11 // pred_region
          _
        $region20: #{tpu_custom_call.1} parent=11 // pred_fallthru
          _
        // Predicated region
        $region21: #{tpu_custom_call.1} parent=11 // pred_check
          %p229 = pneg %p110
        $region22: #{tpu_custom_call.1} parent=11 // pred_check_branch
          %231 = sbr.rel (%p229) target = $region24
        $region23: #{tpu_custom_call.1} parent=11 // pred_region
          %233 = vsyncadd [#allocation6], 0
          %s234 = sshll.u32 %s3, 4
          %s235 = int_to_ptr.hbm [resolvable:$true] %s234
          %s236 = sshll.u32 [#allocation7], 4
          %s237 = int_to_ptr.vmem [resolvable:$true] %s236
          %242 = dma.hbm_to_vmem [thread:$0]  %s235, 2048, %s237, [#allocation6], 128, 128, 8
        $region24: #{tpu_custom_call.1} parent=11 // pred_fallthru
          _
        // Predicated region
        $region25: #{tpu_custom_call.1} parent=11 // pred_check
          %p243 = pneg %p131
        $region26: #{tpu_custom_call.1} parent=11 // pred_check_branch
          %245 = sbr.rel (%p243) target = $region28
        $region27: #{tpu_custom_call.1} parent=11 // pred_region
          _
        $region28: #{tpu_custom_call.1} parent=11 // pred_fallthru
          _
        // Predicated region
        $region29: #{tpu_custom_call.1} parent=11 // pred_check
          %p246 = pneg %p152
        $region30: #{tpu_custom_call.1} parent=11 // pred_check_branch
          %248 = sbr.rel (%p246) target = $region32
        $region31: #{tpu_custom_call.1} parent=11 // pred_region
          %250 = vsyncadd [#allocation9], 0
          %s251 = sshll.u32 %s5, 4
          %s252 = int_to_ptr.hbm [resolvable:$true] %s251
          %s253 = sshll.u32 [#allocation8], 4
          %s254 = int_to_ptr.vmem [resolvable:$true] %s253
          %259 = dma.hbm_to_vmem [thread:$0]  %s252, 2048, %s254, [#allocation9], 128, 128, 8
        $region32: #{tpu_custom_call.1} parent=11 // pred_fallthru
          _
        // Predicated region
        $region33: #{tpu_custom_call.1} parent=11 // pred_check
          %p260 = pneg %p173
        $region34: #{tpu_custom_call.1} parent=11 // pred_check_branch
          %262 = sbr.rel (%p260) target = $region36
        $region35: #{tpu_custom_call.1} parent=11 // pred_region
          _
        $region36: #{tpu_custom_call.1} parent=11 // pred_fallthru
          _
      $region12: #{tpu_custom_call.1} parent=5 // pred_fallthru
        _
      %p263 = scmp.lt.s32.totalorder %s21, 2
      // Predicated region
      $region37: #{tpu_custom_call.1} parent=5 // pred_check
        %p264 = pneg %p263
      $region38: #{tpu_custom_call.1} parent=5 // pred_check_branch
        %266 = sbr.rel (%p264) target = $region40
      $region39: #{tpu_custom_call.1} parent=5 // pred_region
        // Predicated region
        $region41: #{tpu_custom_call.1} parent=39 // pred_check
          %p267 = pneg %p41
        $region42: #{tpu_custom_call.1} parent=39 // pred_check_branch
          %269 = sbr.rel (%p267) target = $region44
        $region43: #{tpu_custom_call.1} parent=39 // pred_region
          %s270 = sand.u32 %s31, 1
          %s271 = scalar_lea.sflag [#allocation3], %s270
          %s272 = sand.u32 %s31, 1
          %s273 = smul.addr %s272, 8
          %s274 = scalar_lea.vmem [#allocation2], %s273
          %276 = vsyncadd %s271, 0
          %s277 = smul.addr %s21, 8
          %s278 = scalar_lea.hbm %s0, %s277
          %s280 = sshll.u32 %s278, 4
          %s281 = int_to_ptr.hbm [resolvable:$true] %s280
          %s282 = sshll.u32 %s274, 4
          %s283 = int_to_ptr.vmem [resolvable:$true] %s282
          %285 = dma.hbm_to_vmem [thread:$0]  %s281, 128, %s283, %s271
        $region44: #{tpu_custom_call.1} parent=39 // pred_fallthru
          _
      $region40: #{tpu_custom_call.1} parent=5 // pred_fallthru
        _
      %p286 = scmp.le.s32.totalorder 1, %s21
      %p287 = scmp.lt.s32.totalorder %s21, 3
      %p288 = pnand %p286, %p287
      %p289 = pneg %p288
      // Predicated region
      $region45: #{tpu_custom_call.1} parent=5 // pred_check
        _
      $region46: #{tpu_custom_call.1} parent=5 // pred_check_branch
        %291 = sbr.rel (%p288) target = $region48
      $region47: #{tpu_custom_call.1} parent=5 // pred_region
        %s292 = ssub.s32 %s21, 1
        %s293 = sand.u32 %s34, 1
        %s294 = scalar_lea.sflag [#allocation3], %s293
        %s295 = sand.u32 %s34, 1
        %s296 = smul.addr %s295, 8
        %s297 = scalar_lea.vmem [#allocation2], %s296
        // Predicated region
        $region49: #{tpu_custom_call.1} parent=47 // pred_check
          %p298 = pneg %p47
        $region50: #{tpu_custom_call.1} parent=47 // pred_check_branch
          %300 = sbr.rel (%p298) target = $region52
        $region51: #{tpu_custom_call.1} parent=47 // pred_region
          %302 = dma.done %s294, 128
        $region52: #{tpu_custom_call.1} parent=47 // pred_fallthru
          _
        // Predicated region
        $region53: #{tpu_custom_call.1} parent=47 // pred_check
          %p303 = pneg %p68
        $region54: #{tpu_custom_call.1} parent=47 // pred_check_branch
          %305 = sbr.rel (%p303) target = $region56
        $region55: #{tpu_custom_call.1} parent=47 // pred_region
          %307 = dma.done [#allocation6], 16
        $region56: #{tpu_custom_call.1} parent=47 // pred_fallthru
          _
        // Predicated region
        $region57: #{tpu_custom_call.1} parent=47 // pred_check
          %p308 = pneg %p110
        $region58: #{tpu_custom_call.1} parent=47 // pred_check_branch
          %310 = sbr.rel (%p308) target = $region60
        $region59: #{tpu_custom_call.1} parent=47 // pred_region
          %312 = dma.done [#allocation6], 2048
        $region60: #{tpu_custom_call.1} parent=47 // pred_fallthru
          _
        // Predicated region
        $region61: #{tpu_custom_call.1} parent=47 // pred_check
          %p313 = pneg %p152
        $region62: #{tpu_custom_call.1} parent=47 // pred_check_branch
          %315 = sbr.rel (%p313) target = $region64
        $region63: #{tpu_custom_call.1} parent=47 // pred_region
          %317 = dma.done [#allocation9], 2048
        $region64: #{tpu_custom_call.1} parent=47 // pred_fallthru
          _
        %s318 = sand.u32 %s34, 1
        %s319 = scalar_lea.sflag [#allocation3], %s318
        %s320 = sand.u32 %s34, 1
        %s321 = smul.addr %s320, 8
        %s322 = scalar_lea.vmem [#allocation2], %s321
        %p323 = pneg %p47
        %p324 = pneg %p44
        %p325 = pneg %p68
        %p326 = pneg %p65
        %p327 = pneg %p89
        %p328 = pneg %p86
        %p329 = pneg %p110
        %p330 = pneg %p107
        %p331 = pneg %p131
        %p332 = pneg %p128
        %p333 = pneg %p152
        %p334 = pneg %p149
        %p335 = pneg %p173
        %p336 = pneg %p170
        %p337 = pneg %p199
        %p338 = pneg %p196
        %s339 = sand.u32 %s186, 1
        %s340 = scalar_lea.sflag [#allocation4], %s339
        %s341 = sand.u32 %s186, 1
        %s342 = smul.addr %s341, 8
        %s343 = scalar_lea.vmem [#allocation10], %s342
        %v344 = vld [vmem:[%s297] sm:$0xff]
        %345 = vadd.xlane.f32.xlu0 %v344
        %v346 = vpop.xlane.xlu0 %345
        %v347 = vmul.f32 %v346, 0.03125
        %v348 = vmul.f32 %v344, %v344
        %349 = vadd.xlane.f32.xlu0 %v348
        %v350 = vpop.xlane.xlu0 %349
        %v351 = vmul.f32 %v350, 0.03125
        %v352 = vmul.f32 %v347, %v347
        %v353 = vsub.f32 %v351, %v352
        %v354 = vmax.f32 %v353, 0.0
        %v355 = vsub.f32 %v344, %v347
        %v356 = vadd.f32 %v354, 1e-05
        %v357 = vrsqrt.pop %v356
        %v358 = vmul.f32 %v357, %v356
        %v359 = vmul.f32 %v358, %v357
        %v360 = vmul.f32 0.5, %v359
        %v361 = vsub.f32 1.5, %v360
        %v362 = vmul.f32 %v357, %v361
        %vm363 = vweird.f32 %v356
        %vm364 = vweird.f32 %v357
        %vm365 = vmor %vm363, %vm364
        %v366 = vsel %vm365, %v357, %v362
        %v367 = vmul.f32 %v355, %v366
        %v368 = vld [vmem:[#allocation5] sm:$0x1]
        %v370 = vperm.slane %v368, 0
        %v372 = vmul.f32 %v367, %v370
        %v373 = vld [vmem:[%s2] sm:$0x1]
        %v375 = vperm.slane %v373, 0
        %v377 = vadd.f32 %v372, %v375
        %v378 = vld [vmem:[#allocation7] sm:$0xff]
        %v379 = vld [vmem:[#allocation7 + $0x8] sm:$0xff]
        %v380 = vld [vmem:[#allocation7 + $0x10] sm:$0xff]
        %v381 = vld [vmem:[#allocation7 + $0x18] sm:$0xff]
        %v382 = vld [vmem:[#allocation7 + $0x20] sm:$0xff]
        %v383 = vld [vmem:[#allocation7 + $0x28] sm:$0xff]
        %v384 = vld [vmem:[#allocation7 + $0x30] sm:$0xff]
        %v385 = vld [vmem:[#allocation7 + $0x38] sm:$0xff]
        %v386 = vld [vmem:[#allocation7 + $0x40] sm:$0xff]
        %v387 = vld [vmem:[#allocation7 + $0x48] sm:$0xff]
        %v388 = vld [vmem:[#allocation7 + $0x50] sm:$0xff]
        %v389 = vld [vmem:[#allocation7 + $0x58] sm:$0xff]
        %v390 = vld [vmem:[#allocation7 + $0x60] sm:$0xff]
        %v391 = vld [vmem:[#allocation7 + $0x68] sm:$0xff]
        %v392 = vld [vmem:[#allocation7 + $0x70] sm:$0xff]
        %v393 = vld [vmem:[#allocation7 + $0x78] sm:$0xff]
        %v394 = vld [vmem:[%s4] sm:$0x1]
        %v396 = vperm.slane %v394, 0
        %398 = vmatpush.msra.mxu0 %v393
        %399 = vmatpush.msra.mxu0 %v392
        %400 = vmatpush.msra.mxu0 %v391
        %401 = vmatpush.msra.mxu0 %v390
        %402 = vmatpush.msra.mxu0 %v389
        %403 = vmatpush.msra.mxu0 %v388
        %404 = vmatpush.msra.mxu0 %v387
        %405 = vmatpush.msra.mxu0 %v386
        %406 = vmatpush.msra.mxu0 %v385
        %407 = vmatpush.msra.mxu0 %v384
        %408 = vmatpush.msra.mxu0 %v383
        %409 = vmatpush.msra.mxu0 %v382
        %410 = vmatpush.msra.mxu0 %v381
        %411 = vmatpush.msra.mxu0 %v380
        %412 = vmatpush.msra.mxu0 %v379
        %413 = vmatpush.msra.mxu0 %v378
        %414 = vmatmul.f32.gmra.mxu0 %v377
        %v415 = vpop.f32.mrf.mxu0
        %v416 = vadd.f32 %v396, %v415
        %417 = vdwg.mxu0
        %v418 = vxor.u32 %v416, 2147483648
        %v419 = vmul.f32 %v418, 1.442695
        %v420 = vpow.pop %v419
        %v421 = vadd.f32 %v420, 1.0
        %v422 = vrcp.pop %v421
        %v423 = vmul.f32 %v421, %v422
        %v424 = vsub.f32 1.0, %v423
        %v425 = vmul.f32 %v422, %v424
        %v426 = vadd.f32 %v422, %v425
        %vm427 = vweird.f32 %v421
        %vm428 = vweird.f32 %v422
        %vm429 = vmor %vm427, %vm428
        %v430 = vsel %vm429, %v422, %v426
        %v431 = vand.u32 2147483647, %v421
        %vm432 = vcmp.eq.f32.partialorder %v431, 8.507059e+37
        %v433 = vand.u32 %v421, 2147483648
        %v434 = vor.u32 1.1754944e-38, %v433
        %v435 = vsel %vm432, %v434, %v430
        %v436 = vmul.f32 1.0, %v435
        %v437 = vmul.f32 %v416, %v436
        %v438 = vld [vmem:[#allocation8] sm:$0xff]
        %v439 = vld [vmem:[#allocation8 + $0x8] sm:$0xff]
        %v440 = vld [vmem:[#allocation8 + $0x10] sm:$0xff]
        %v441 = vld [vmem:[#allocation8 + $0x18] sm:$0xff]
        %v442 = vld [vmem:[#allocation8 + $0x20] sm:$0xff]
        %v443 = vld [vmem:[#allocation8 + $0x28] sm:$0xff]
        %v444 = vld [vmem:[#allocation8 + $0x30] sm:$0xff]
        %v445 = vld [vmem:[#allocation8 + $0x38] sm:$0xff]
        %v446 = vld [vmem:[#allocation8 + $0x40] sm:$0xff]
        %v447 = vld [vmem:[#allocation8 + $0x48] sm:$0xff]
        %v448 = vld [vmem:[#allocation8 + $0x50] sm:$0xff]
        %v449 = vld [vmem:[#allocation8 + $0x58] sm:$0xff]
        %v450 = vld [vmem:[#allocation8 + $0x60] sm:$0xff]
        %v451 = vld [vmem:[#allocation8 + $0x68] sm:$0xff]
        %v452 = vld [vmem:[#allocation8 + $0x70] sm:$0xff]
        %v453 = vld [vmem:[#allocation8 + $0x78] sm:$0xff]
        %v454 = vld [vmem:[%s6] sm:$0x1]
        %v456 = vperm.slane %v454, 0
        %458 = vmatpush.msra.mxu0 %v453
        %459 = vmatpush.msra.mxu0 %v452
        %460 = vmatpush.msra.mxu0 %v451
        %461 = vmatpush.msra.mxu0 %v450
        %462 = vmatpush.msra.mxu0 %v449
        %463 = vmatpush.msra.mxu0 %v448
        %464 = vmatpush.msra.mxu0 %v447
        %465 = vmatpush.msra.mxu0 %v446
        %466 = vmatpush.msra.mxu0 %v445
        %467 = vmatpush.msra.mxu0 %v444
        %468 = vmatpush.msra.mxu0 %v443
        %469 = vmatpush.msra.mxu0 %v442
        %470 = vmatpush.msra.mxu0 %v441
        %471 = vmatpush.msra.mxu0 %v440
        %472 = vmatpush.msra.mxu0 %v439
        %473 = vmatpush.msra.mxu0 %v438
        %474 = vmatmul.f32.gmra.mxu0 %v437
        %v475 = vpop.f32.mrf.mxu0
        %v476 = vadd.f32 %v456, %v475
        %477 = vdwg.mxu0
        %478 = vst [vmem:[%s343] sm:$0xff] %v476
        %s479 = sand.u32 %s186, 1
        %s480 = scalar_lea.sflag [#allocation4], %s479
        %s481 = sand.u32 %s186, 1
        %s482 = smul.addr %s481, 8
        %s483 = scalar_lea.vmem [#allocation10], %s482
        // Predicated region
        $region65: #{tpu_custom_call.1} parent=47 // pred_check
          %p484 = pneg %p196
        $region66: #{tpu_custom_call.1} parent=47 // pred_check_branch
          %486 = sbr.rel (%p484) target = $region68
        $region67: #{tpu_custom_call.1} parent=47 // pred_region
          %488 = vsyncadd %s480, 0
          %s489 = smul.addr %s26, 8
          %s490 = scalar_lea.hbm %s7, %s489
          %s492 = sshll.u32 %s483, 4
          %s493 = int_to_ptr.vmem [resolvable:$true] %s492
          %s494 = sshll.u32 %s490, 4
          %s495 = int_to_ptr.hbm [resolvable:$true] %s494
          %497 = dma.vmem_to_hbm [thread:$0]  %s493, 128, %s495, %s480
        $region68: #{tpu_custom_call.1} parent=47 // pred_fallthru
          _
      $region48: #{tpu_custom_call.1} parent=5 // pred_fallthru
        _
      %p498 = scmp.le.s32.totalorder 2, %s21
      // Predicated region
      $region69: #{tpu_custom_call.1} parent=5 // pred_check
        %p499 = pneg %p498
      $region70: #{tpu_custom_call.1} parent=5 // pred_check_branch
        %501 = sbr.rel (%p499) target = $region72
      $region71: #{tpu_custom_call.1} parent=5 // pred_region
        %s502 = ssub.s32 %s21, 2
        // Predicated region
        $region73: #{tpu_custom_call.1} parent=71 // pred_check
          %p503 = pneg %p202
        $region74: #{tpu_custom_call.1} parent=71 // pred_check_branch
          %505 = sbr.rel (%p503) target = $region76
        $region75: #{tpu_custom_call.1} parent=71 // pred_region
          %s506 = sand.u32 %s187, 1
          %s507 = scalar_lea.sflag [#allocation4], %s506
          %s508 = sand.u32 %s187, 1
          %s509 = smul.addr %s508, 8
          %s510 = scalar_lea.vmem [#allocation10], %s509
          %512 = dma.done %s507, 128
        $region76: #{tpu_custom_call.1} parent=71 // pred_fallthru
          _
      $region72: #{tpu_custom_call.1} parent=5 // pred_fallthru
        _
    $region6: #{tpu_custom_call.1} parent=1 // loop_footer
      %s25 = sadd.s32 1, %s21
    $region7: #{tpu_custom_call.1} parent=1 // loop_footer_branch
      %20 = sbr.rel target = $region3
    $region8: #{tpu_custom_call.1} parent=1 // loop_exit
      _
    %513 = vsyncpa [#allocation3], 1
    %s514 = scalar_lea.sflag [#allocation3], 1
    %515 = vsyncpa %s514, 1
    %516 = vsyncpa [#allocation6], 1
    %517 = vsyncpa [#allocation9], 1
    %518 = vsyncpa [#allocation4], 1
    %s519 = scalar_lea.sflag [#allocation4], 1
    %520 = vsyncpa %s519, 1

</llo_original>
